<compile_context>
chip_gen: v7x
topology: tpu7x:2x2x1
jax: 0.10.0
libtpu: 0.0.40
codegen_flags: <defaults>
</compile_context>

<pallas_src>
import math
import jax
import jax.numpy as jnp
from jax.experimental import pallas as pl
from jax.experimental.pallas import tpu as pltpu


def _sinusoidal_emb_kernel(x_ref, w_ref, out_ref):
    # Lane-dense layout: batch on the lane (last) axis.
    #   x_ref  : (1, tb)              f32 timesteps for this tile
    #   w_ref  : (half_dim, 1)        f32 weights pre-scaled by 2*pi (VMEM-resident)
    #   out_ref: (1 + 2*half_dim, tb) output columns for this tile
    x = x_ref[...]                     # (1, tb)
    w = w_ref[...]                     # (half_dim, 1)

    freqs = w * x                      # (half_dim, tb); 2*pi already folded into w

    # Assemble the whole output column block in-register and store once
    # (lane-dense, unmasked vst; concat is along the sublane axis).
    col = jnp.concatenate([x, jnp.sin(freqs), jnp.cos(freqs)], axis=0)  # (out_dim, tb)
    out_ref[...] = col.astype(out_ref.dtype)


def _pick_tile(B, block_b):
    """Lane-tile size: multiple of 128, >=2 grid steps for large B (v7x megacore)."""
    if B <= 256:
        return B                       # single full-extent block (full-dim rule)
    half = -(-B // 2)                  # cdiv(B, 2)
    tb = min(block_b, ((half + 127) // 128) * 128)
    return max(128, tb)


def random_or_learned_sinusoidal_pos_emb(x, weights_2pi, *, block_b=16384,
                                         out_dtype=jnp.float32,
                                         transpose_output=True):
    """Forward of RandomOrLearnedSinusoidalPosEmb.

    Args:
      x:            (B,) float timesteps.
      weights_2pi:  (half_dim,) module weights ALREADY multiplied by 2*pi
                    (fold it once at parameter init, not per call).
      block_b:      lane-tile size cap (rows of the original layout per step).
      out_dtype:    output dtype (bf16 halves writeback if the consumer allows).
      transpose_output: if True return (B, 1+2*half_dim) matching the PyTorch
                    module; if False return the kernel-native lane-dense
                    (1+2*half_dim, B) slab (preferred for a fused consumer).
    """
    x = x.astype(jnp.float32)
    weights_2pi = weights_2pi.astype(jnp.float32)
    B = x.shape[0]
    half_dim = weights_2pi.shape[0]
    out_dim = 1 + 2 * half_dim

    x_row = x.reshape(1, B)                      # batch on lanes (no lane padding)
    w_col = weights_2pi.reshape(half_dim, 1)     # broadcast along lanes in-kernel

    tb = _pick_tile(B, block_b)
    grid = (pl.cdiv(B, tb),)

    out_t = pl.pallas_call(
        _sinusoidal_emb_kernel,
        out_shape=jax.ShapeDtypeStruct((out_dim, B), out_dtype),
        grid=grid,
        in_specs=[
            pl.BlockSpec((1, tb), lambda i: (0, i)),           # x: tiled along lanes
            pl.BlockSpec((half_dim, 1), lambda i: (0, 0)),     # weights: VMEM-resident
        ],
        out_specs=pl.BlockSpec((out_dim, tb), lambda i: (0, i)),
        compiler_params=pltpu.CompilerParams(
            dimension_semantics=("parallel",),                 # shard tiles on v7x's 2 TCs
        ),
    )(x_row, w_col)

    if transpose_output:
        # Layout plumbing only (outside the kernel); a fused consumer should
        # take the (out_dim, B) slab directly via transpose_output=False.
        return out_t.T
    return out_t


if __name__ == "__main__":
    dim = 32                       # module's `dim`; must be even
    half_dim = dim // 2
    B = 8

    key = jax.random.PRNGKey(0)
    k_w, k_x = jax.random.split(key)
    # Deterministic "parameter" init, mirroring torch.randn(half_dim)
    weights = jax.random.normal(k_w, (half_dim,), dtype=jnp.float32)
    # Fold 2*pi into the parameter ONCE at creation time (perf review item).
    weights_2pi = weights * (2.0 * math.pi)
    # Example timesteps input x: (B,)
    x = jax.random.uniform(k_x, (B,), dtype=jnp.float32) * 10.0

    out = random_or_learned_sinusoidal_pos_emb(x, weights_2pi)
    out = jax.block_until_ready(out)

    # Reference check in plain JAX (against the raw-weights formulation)
    freqs_ref = x[:, None] * weights[None, :] * (2.0 * math.pi)
    ref = jnp.concatenate([x[:, None], jnp.sin(freqs_ref), jnp.cos(freqs_ref)], axis=-1)
    assert out.shape == (B, dim + 1), out.shape
    assert jnp.allclose(out, ref, atol=1e-5, rtol=1e-5)

    print("KERNEL_OK")
</pallas_src>

<mosaic_0001>
module attributes {stable_mosaic.version = 11 : i64} {
  func.func @_sinusoidal_emb_kernel(%arg0: i32, %arg1: memref<1x8xf32, #tpu.memory_space<vmem>>, %arg2: memref<16x1xf32, #tpu.memory_space<vmem>>, %arg3: memref<33x8xf32, #tpu.memory_space<vmem>>) attributes {dimension_semantics = [#tpu.dimension_semantics<parallel>], iteration_bounds = array<i64: 1>, scalar_prefetch = 0 : i64, scratch_operands = 0 : i64, tpu.core_type = #tpu.core_type<tc>, window_params = [{transform_indices = @transform_0, window_bounds = array<i64: 1, 8>}, {pipeline_mode = #tpu.pipeline_mode<synchronous>, transform_indices = @transform_1, window_bounds = array<i64: 16, 1>}, {transform_indices = @transform_2, window_bounds = array<i64: 33, 8>}]} {
    %c0 = arith.constant 0 : index
    %c0_0 = arith.constant 0 : index
    %0 = vector.load %arg1[%c0, %c0_0] : memref<1x8xf32, #tpu.memory_space<vmem>>, vector<1x8xf32>
    %c0_1 = arith.constant 0 : index
    %c0_2 = arith.constant 0 : index
    %1 = vector.load %arg2[%c0_1, %c0_2] : memref<16x1xf32, #tpu.memory_space<vmem>>, vector<16x1xf32>
    %2 = vector.broadcast %1 : vector<16x1xf32> to vector<16x8xf32>
    %3 = vector.broadcast %0 : vector<1x8xf32> to vector<16x8xf32>
    %4 = arith.mulf %2, %3 : vector<16x8xf32>
    %5 = math.sin %4 : vector<16x8xf32>
    %6 = math.cos %4 : vector<16x8xf32>
    %7 = tpu.concatenate %0, %5, %6 in 0 : vector<1x8xf32>, vector<16x8xf32>, vector<16x8xf32> -> vector<33x8xf32>
    %c0_3 = arith.constant 0 : index
    %c0_4 = arith.constant 0 : index
    %8 = vector.load %arg3[%c0_3, %c0_4] : memref<33x8xf32, #tpu.memory_space<vmem>>, vector<33x8xf32>
    tpu.vector_store %arg3[%c0_3, %c0_4], %7 {strides = array<i32>} : memref<33x8xf32, #tpu.memory_space<vmem>>, vector<33x8xf32>,
    return
  }
  func.func @transform_0(%arg0: i32) -> (i32, i32) {
    %c0_i32 = arith.constant 0 : i32
    %c0_i32_0 = arith.constant 0 : i32
    return %c0_i32, %arg0 : i32, i32
  }
  func.func @transform_1(%arg0: i32) -> (i32, i32) {
    %c0_i32 = arith.constant 0 : i32
    %c0_i32_0 = arith.constant 0 : i32
    %c0_i32_1 = arith.constant 0 : i32
    return %c0_i32, %c0_i32_0 : i32, i32
  }
  func.func @transform_2(%arg0: i32) -> (i32, i32) {
    %c0_i32 = arith.constant 0 : i32
    %c0_i32_0 = arith.constant 0 : i32
    return %c0_i32, %arg0 : i32, i32
  }
}

</mosaic_0001>

<llo_original>
// kernel: tpu_custom_call.1
$region0: #{tpu_custom_call.1}
  #allocation0 [shape = 'u32[]', space=smem, size = 0x4, offset = 0x4, fixed_abs, tag = 'smem constant byte address 0x4 - core index']
  #allocation1 [shape = 'u32[144,128]{1,0:T(1,128)}', space=vmem, size = 0x12000, scoped, tag = 'internal scratch']
  %s0 = inlined_call_operand.vmem [shape: f32[1,8], index: 0, kind: input, shape index: {}]
  %s1 = inlined_call_operand.vmem [shape: f32[16,1], index: 1, kind: input, shape index: {}]
  %s2 = inlined_call_operand.vmem [shape: f32[33,8], index: 2, kind: output, shape index: {}]
  %s3 = sld [smem:[#allocation0]]
  $region18: #{tpu_custom_call.1} parent=0
    _
  %s5 = ssub.s32 1, %s3
  %s6 = scalar_select 0, %s5, %s3
  // Predicated region
  $region2: #{tpu_custom_call.1} parent=0 // pred_check
    _
  $region3: #{tpu_custom_call.1} parent=0 // pred_check_branch
    %8 = sbr.rel (0) target = $region5
  $region4: #{tpu_custom_call.1} parent=0 // pred_region
    _
  $region5: #{tpu_custom_call.1} parent=0 // pred_fallthru
    _
  // Predicated region
  $region6: #{tpu_custom_call.1} parent=0 // pred_check
    _
  $region7: #{tpu_custom_call.1} parent=0 // pred_check_branch
    %10 = sbr.rel (0) target = $region9
  $region8: #{tpu_custom_call.1} parent=0 // pred_region
    _
  $region9: #{tpu_custom_call.1} parent=0 // pred_fallthru
    _
  %v11 = vld [vmem:[%s0] sm:$0x1]
  %v12 = vld [vmem:[%s1] sm:$0xff]
  %v13 = vld [vmem:[%s1 + $0x8] sm:$0xff]
  %15 = vset.pattern.permute.xlu0 0
  %16 = vperm.xlu0 %15, %v12
  %v17 = vpop.permute.xlu0 %16
  %20 = vset.pattern.permute.xlu0 0
  %21 = vperm.xlu0 %20, %v13
  %v22 = vpop.permute.xlu0 %21
  %v25 = vlaneseq
  %v26 = vshrl.u32 %v25, 7
  %v27 = vsub.s32 0, %v26
  %v28 = vrot.slane %v11, %v27
  %v30 = vmul.f32 %v17, %v28
  %v31 = vmul.f32 %v22, %v28
  %v32 = vand.u32 2147483647, %v30
  %vm33 = vcmp.le.f32.partialorder %v32, 0.7853982
  %vm34 = vcmp.lt.s32.totalorder %v30, 0
  %v35 = vand.u32 %v30, 2139095040
  %v36 = vshrl.u32 %v35, 23
  %v37 = vsub.s32 %v36, 127
  %v38 = vand.u32 2147483647, %v30
  %v39 = vand.u32 %v38, 8388607
  %v40 = vor.u32 %v39, 8388608
  %v41 = vsub.s32 0, %v40
  %v42 = vadd.s32 %v37, 1
  %vm43 = vcmp.gt.s32.totalorder %v42, 0
  %v44 = vsel %vm43, %v42, 0
  %v45 = vshrl.u32 %v44, 5
  %v46 = vand.u32 %v44, 31
  %v47 = vsub.s32 32, %v46
  %v48 = vshrl.u32 683565275, %v47
  %v49 = vshll.u32 683565275, %v46
  %v50 = vshrl.u32 2475754826, %v47
  %v51 = vor.u32 %v49, %v50
  %v52 = vshll.u32 2475754826, %v46
  %v53 = vshrl.u32 2131351028, %v47
  %v54 = vor.u32 %v52, %v53
  %v55 = vshll.u32 2131351028, %v46
  %v56 = vshrl.u32 2102212464, %v47
  %v57 = vor.u32 %v55, %v56
  %v58 = vshll.u32 2102212464, %v46
  %v59 = vshrl.u32 920167782, %v47
  %v60 = vor.u32 %v58, %v59
  %v61 = vshll.u32 920167782, %v46
  %v62 = vshrl.u32 1326507024, %v47
  %v63 = vor.u32 %v61, %v62
  %vm64 = vcmp.lt.s32.totalorder %v45, 1
  %vm65 = vcmp.lt.s32.totalorder %v45, 2
  %vm66 = vcmp.lt.s32.totalorder %v45, 3
  %vm67 = vcmp.lt.s32.totalorder %v45, 4
  %v68 = vsel %vm64, %v48, %v51
  %v69 = vsel %vm67, %v57, 2102212464
  %v70 = vsel %vm66, %v54, %v69
  %v71 = vsel %vm65, %v68, %v70
  %v72 = vsel %vm64, %v51, %v54
  %v73 = vsel %vm67, %v60, 920167782
  %v74 = vsel %vm66, %v57, %v73
  %v75 = vsel %vm65, %v72, %v74
  %v76 = vsel %vm64, %v54, %v57
  %v77 = vsel %vm67, %v63, 1326507024
  %v78 = vsel %vm66, %v60, %v77
  %v79 = vsel %vm65, %v76, %v78
  %v80 = vshll.u32 %v40, 8
  %v81 = vmul.u32.u64.compose %v80, %v79
  %v82 = vextract.low.u32 %v81
  %v83 = vextract.high.u32 %v81
  %v84 = vmul.u32.u64.compose %v80, %v75
  %v85 = vextract.low.u32 %v84
  %v86 = vextract.high.u32 %v84
  %v87 = vmul.u32 %v80, %v71
  %v88 = vadd.s32 %v83, %v85
  %vm89 = vc.u32 %v83, %v85
  %v90 = vadd.s32 %v86, 1
  %v91 = vsel %vm89, %v90, %v86
  %v92 = vadd.s32 %v87, %v91
  %v93 = vadd.s32 %v92, 536870912
  %v94 = vshrl.u32 %v93, 30
  %v95 = vshll.u32 %v94, 30
  %v96 = vsub.s32 %v92, %v95
  %vm97 = vcmp.lt.s32.totalorder %v96, 0
  %v98 = vsub.s32 0, %v96
  %v99 = vsel %vm97, %v98, %v96
  %v100 = vclz %v99
  %v101 = vsub.s32 %v100, 2
  %vm102 = vcmp.gt.s32.totalorder 0, %v101
  %v103 = vsel %vm102, 0, %v101
  %v104 = vsub.s32 32, %v103
  %v105 = vshll.u32 %v96, %v103
  %v106 = vshrl.u32 %v88, %v104
  %v107 = vor.u32 %v105, %v106
  %v108 = vsub.s32 4294967266, %v103
  %v109 = vadd.s32 %v108, 127
  %v110 = vshll.u32 %v109, 23
  %v111 = vor.u32 4788187, %v110
  %v112 = vand.u32 2147483647, %v111
  %v114 = vcvt.s32.f32 %v107
  %v115 = vmul.f32 %v114, %v112
  %v116 = vxor.u32 %v115, 2147483648
  %v117 = vsel %vm34, %v116, %v115
  %v118 = vsub.s32 4, %v94
  %v119 = vsel %vm34, %v118, %v94
  %v120 = vsel %vm33, %v30, %v117
  %v121 = vsel %vm33, 0, %v119
  %v122 = vcosq.f32.pop %v120
  %v123 = vsinq.f32.pop %v120
  %vm124 = vweird.f32 %v30
  %v125 = vadd.s32 %v121, 3
  %v126 = vand.u32 %v125, 3
  %vm127 = vcmp.lt.s32.totalorder %v126, 2
  %vm128 = vcmp.eq.s32.totalorder %v126, 0
  %v129 = vxor.u32 %v123, 2147483648
  %v130 = vsel %vm128, %v122, %v129
  %vm131 = vcmp.eq.s32.totalorder %v126, 2
  %v132 = vxor.u32 %v122, 2147483648
  %v133 = vsel %vm131, %v132, %v123
  %v134 = vsel %vm127, %v130, %v133
  %v135 = vsel %vm124, nan, %v134
  %v136 = vand.u32 2147483647, %v31
  %vm137 = vcmp.le.f32.partialorder %v136, 0.7853982
  %vm138 = vcmp.lt.s32.totalorder %v31, 0
  %v139 = vand.u32 %v31, 2139095040
  %v140 = vshrl.u32 %v139, 23
  %v141 = vsub.s32 %v140, 127
  %v142 = vand.u32 2147483647, %v31
  %v143 = vand.u32 %v142, 8388607
  %v144 = vor.u32 %v143, 8388608
  %v145 = vsub.s32 0, %v144
  %v146 = vadd.s32 %v141, 1
  %vm147 = vcmp.gt.s32.totalorder %v146, 0
  %v148 = vsel %vm147, %v146, 0
  %v149 = vshrl.u32 %v148, 5
  %v150 = vand.u32 %v148, 31
  %v151 = vsub.s32 32, %v150
  %v152 = vshrl.u32 683565275, %v151
  %v153 = vshll.u32 683565275, %v150
  %v154 = vshrl.u32 2475754826, %v151
  %v155 = vor.u32 %v153, %v154
  %v156 = vshll.u32 2475754826, %v150
  %v157 = vshrl.u32 2131351028, %v151
  %v158 = vor.u32 %v156, %v157
  %v159 = vshll.u32 2131351028, %v150
  %v160 = vshrl.u32 2102212464, %v151
  %v161 = vor.u32 %v159, %v160
  %v162 = vshll.u32 2102212464, %v150
  %v163 = vshrl.u32 920167782, %v151
  %v164 = vor.u32 %v162, %v163
  %v165 = vshll.u32 920167782, %v150
  %v166 = vshrl.u32 1326507024, %v151
  %v167 = vor.u32 %v165, %v166
  %vm168 = vcmp.lt.s32.totalorder %v149, 1
  %vm169 = vcmp.lt.s32.totalorder %v149, 2
  %vm170 = vcmp.lt.s32.totalorder %v149, 3
  %vm171 = vcmp.lt.s32.totalorder %v149, 4
  %v172 = vsel %vm168, %v152, %v155
  %v173 = vsel %vm171, %v161, 2102212464
  %v174 = vsel %vm170, %v158, %v173
  %v175 = vsel %vm169, %v172, %v174
  %v176 = vsel %vm168, %v155, %v158
  %v177 = vsel %vm171, %v164, 920167782
  %v178 = vsel %vm170, %v161, %v177
  %v179 = vsel %vm169, %v176, %v178
  %v180 = vsel %vm168, %v158, %v161
  %v181 = vsel %vm171, %v167, 1326507024
  %v182 = vsel %vm170, %v164, %v181
  %v183 = vsel %vm169, %v180, %v182
  %v184 = vshll.u32 %v144, 8
  %v185 = vmul.u32.u64.compose %v184, %v183
  %v186 = vextract.low.u32 %v185
  %v187 = vextract.high.u32 %v185
  %v188 = vmul.u32.u64.compose %v184, %v179
  %v189 = vextract.low.u32 %v188
  %v190 = vextract.high.u32 %v188
  %v191 = vmul.u32 %v184, %v175
  %v192 = vadd.s32 %v187, %v189
  %vm193 = vc.u32 %v187, %v189
  %v194 = vadd.s32 %v190, 1
  %v195 = vsel %vm193, %v194, %v190
  %v196 = vadd.s32 %v191, %v195
  %v197 = vadd.s32 %v196, 536870912
  %v198 = vshrl.u32 %v197, 30
  %v199 = vshll.u32 %v198, 30
  %v200 = vsub.s32 %v196, %v199
  %vm201 = vcmp.lt.s32.totalorder %v200, 0
  %v202 = vsub.s32 0, %v200
  %v203 = vsel %vm201, %v202, %v200
  %v204 = vclz %v203
  %v205 = vsub.s32 %v204, 2
  %vm206 = vcmp.gt.s32.totalorder 0, %v205
  %v207 = vsel %vm206, 0, %v205
  %v208 = vsub.s32 32, %v207
  %v209 = vshll.u32 %v200, %v207
  %v210 = vshrl.u32 %v192, %v208
  %v211 = vor.u32 %v209, %v210
  %v212 = vsub.s32 4294967266, %v207
  %v213 = vadd.s32 %v212, 127
  %v214 = vshll.u32 %v213, 23
  %v215 = vor.u32 4788187, %v214
  %v216 = vand.u32 2147483647, %v215
  %v218 = vcvt.s32.f32 %v211
  %v219 = vmul.f32 %v218, %v216
  %v220 = vxor.u32 %v219, 2147483648
  %v221 = vsel %vm138, %v220, %v219
  %v222 = vsub.s32 4, %v198
  %v223 = vsel %vm138, %v222, %v198
  %v224 = vsel %vm137, %v31, %v221
  %v225 = vsel %vm137, 0, %v223
  %v226 = vcosq.f32.pop %v224
  %v227 = vsinq.f32.pop %v224
  %vm228 = vweird.f32 %v31
  %v229 = vadd.s32 %v225, 3
  %v230 = vand.u32 %v229, 3
  %vm231 = vcmp.lt.s32.totalorder %v230, 2
  %vm232 = vcmp.eq.s32.totalorder %v230, 0
  %v233 = vxor.u32 %v227, 2147483648
  %v234 = vsel %vm232, %v226, %v233
  %vm235 = vcmp.eq.s32.totalorder %v230, 2
  %v236 = vxor.u32 %v226, 2147483648
  %v237 = vsel %vm235, %v236, %v227
  %v238 = vsel %vm231, %v234, %v237
  %v239 = vsel %vm228, nan, %v238
  %v240 = vand.u32 2147483647, %v30
  %vm241 = vcmp.le.f32.partialorder %v240, 0.7853982
  %vm242 = vcmp.lt.s32.totalorder %v30, 0
  %v243 = vand.u32 %v30, 2139095040
  %v244 = vshrl.u32 %v243, 23
  %v245 = vsub.s32 %v244, 127
  %v246 = vand.u32 2147483647, %v30
  %v247 = vand.u32 %v246, 8388607
  %v248 = vor.u32 %v247, 8388608
  %v249 = vsub.s32 0, %v248
  %v250 = vadd.s32 %v245, 1
  %vm251 = vcmp.gt.s32.totalorder %v250, 0
  %v252 = vsel %vm251, %v250, 0
  %v253 = vshrl.u32 %v252, 5
  %v254 = vand.u32 %v252, 31
  %v255 = vsub.s32 32, %v254
  %v256 = vshrl.u32 683565275, %v255
  %v257 = vshll.u32 683565275, %v254
  %v258 = vshrl.u32 2475754826, %v255
  %v259 = vor.u32 %v257, %v258
  %v260 = vshll.u32 2475754826, %v254
  %v261 = vshrl.u32 2131351028, %v255
  %v262 = vor.u32 %v260, %v261
  %v263 = vshll.u32 2131351028, %v254
  %v264 = vshrl.u32 2102212464, %v255
  %v265 = vor.u32 %v263, %v264
  %v266 = vshll.u32 2102212464, %v254
  %v267 = vshrl.u32 920167782, %v255
  %v268 = vor.u32 %v266, %v267
  %v269 = vshll.u32 920167782, %v254
  %v270 = vshrl.u32 1326507024, %v255
  %v271 = vor.u32 %v269, %v270
  %vm272 = vcmp.lt.s32.totalorder %v253, 1
  %vm273 = vcmp.lt.s32.totalorder %v253, 2
  %vm274 = vcmp.lt.s32.totalorder %v253, 3
  %vm275 = vcmp.lt.s32.totalorder %v253, 4
  %v276 = vsel %vm272, %v256, %v259
  %v277 = vsel %vm275, %v265, 2102212464
  %v278 = vsel %vm274, %v262, %v277
  %v279 = vsel %vm273, %v276, %v278
  %v280 = vsel %vm272, %v259, %v262
  %v281 = vsel %vm275, %v268, 920167782
  %v282 = vsel %vm274, %v265, %v281
  %v283 = vsel %vm273, %v280, %v282
  %v284 = vsel %vm272, %v262, %v265
  %v285 = vsel %vm275, %v271, 1326507024
  %v286 = vsel %vm274, %v268, %v285
  %v287 = vsel %vm273, %v284, %v286
  %v288 = vshll.u32 %v248, 8
  %v289 = vmul.u32.u64.compose %v288, %v287
  %v290 = vextract.low.u32 %v289
  %v291 = vextract.high.u32 %v289
  %v292 = vmul.u32.u64.compose %v288, %v283
  %v293 = vextract.low.u32 %v292
  %v294 = vextract.high.u32 %v292
  %v295 = vmul.u32 %v288, %v279
  %v296 = vadd.s32 %v291, %v293
  %vm297 = vc.u32 %v291, %v293
  %v298 = vadd.s32 %v294, 1
  %v299 = vsel %vm297, %v298, %v294
  %v300 = vadd.s32 %v295, %v299
  %v301 = vadd.s32 %v300, 536870912
  %v302 = vshrl.u32 %v301, 30
  %v303 = vshll.u32 %v302, 30
  %v304 = vsub.s32 %v300, %v303
  %vm305 = vcmp.lt.s32.totalorder %v304, 0
  %v306 = vsub.s32 0, %v304
  %v307 = vsel %vm305, %v306, %v304
  %v308 = vclz %v307
  %v309 = vsub.s32 %v308, 2
  %vm310 = vcmp.gt.s32.totalorder 0, %v309
  %v311 = vsel %vm310, 0, %v309
  %v312 = vsub.s32 32, %v311
  %v313 = vshll.u32 %v304, %v311
  %v314 = vshrl.u32 %v296, %v312
  %v315 = vor.u32 %v313, %v314
  %v316 = vsub.s32 4294967266, %v311
  %v317 = vadd.s32 %v316, 127
  %v318 = vshll.u32 %v317, 23
  %v319 = vor.u32 4788187, %v318
  %v320 = vand.u32 2147483647, %v319
  %v322 = vcvt.s32.f32 %v315
  %v323 = vmul.f32 %v322, %v320
  %v324 = vxor.u32 %v323, 2147483648
  %v325 = vsel %vm242, %v324, %v323
  %v326 = vsub.s32 4, %v302
  %v327 = vsel %vm242, %v326, %v302
  %v328 = vsel %vm241, %v30, %v325
  %v329 = vsel %vm241, 0, %v327
  %v330 = vcosq.f32.pop %v328
  %v331 = vsinq.f32.pop %v328
  %vm332 = vweird.f32 %v30
  %v333 = vand.u32 %v329, 3
  %vm334 = vcmp.lt.s32.totalorder %v333, 2
  %vm335 = vcmp.eq.s32.totalorder %v333, 0
  %v336 = vxor.u32 %v331, 2147483648
  %v337 = vsel %vm335, %v330, %v336
  %vm338 = vcmp.eq.s32.totalorder %v333, 2
  %v339 = vxor.u32 %v330, 2147483648
  %v340 = vsel %vm338, %v339, %v331
  %v341 = vsel %vm334, %v337, %v340
  %v342 = vsel %vm332, nan, %v341
  %v343 = vand.u32 2147483647, %v31
  %vm344 = vcmp.le.f32.partialorder %v343, 0.7853982
  %vm345 = vcmp.lt.s32.totalorder %v31, 0
  %v346 = vand.u32 %v31, 2139095040
  %v347 = vshrl.u32 %v346, 23
  %v348 = vsub.s32 %v347, 127
  %v349 = vand.u32 2147483647, %v31
  %v350 = vand.u32 %v349, 8388607
  %v351 = vor.u32 %v350, 8388608
  %v352 = vsub.s32 0, %v351
  %v353 = vadd.s32 %v348, 1
  %vm354 = vcmp.gt.s32.totalorder %v353, 0
  %v355 = vsel %vm354, %v353, 0
  %v356 = vshrl.u32 %v355, 5
  %v357 = vand.u32 %v355, 31
  %v358 = vsub.s32 32, %v357
  %v359 = vshrl.u32 683565275, %v358
  %v360 = vshll.u32 683565275, %v357
  %v361 = vshrl.u32 2475754826, %v358
  %v362 = vor.u32 %v360, %v361
  %v363 = vshll.u32 2475754826, %v357
  %v364 = vshrl.u32 2131351028, %v358
  %v365 = vor.u32 %v363, %v364
  %v366 = vshll.u32 2131351028, %v357
  %v367 = vshrl.u32 2102212464, %v358
  %v368 = vor.u32 %v366, %v367
  %v369 = vshll.u32 2102212464, %v357
  %v370 = vshrl.u32 920167782, %v358
  %v371 = vor.u32 %v369, %v370
  %v372 = vshll.u32 920167782, %v357
  %v373 = vshrl.u32 1326507024, %v358
  %v374 = vor.u32 %v372, %v373
  %vm375 = vcmp.lt.s32.totalorder %v356, 1
  %vm376 = vcmp.lt.s32.totalorder %v356, 2
  %vm377 = vcmp.lt.s32.totalorder %v356, 3
  %vm378 = vcmp.lt.s32.totalorder %v356, 4
  %v379 = vsel %vm375, %v359, %v362
  %v380 = vsel %vm378, %v368, 2102212464
  %v381 = vsel %vm377, %v365, %v380
  %v382 = vsel %vm376, %v379, %v381
  %v383 = vsel %vm375, %v362, %v365
  %v384 = vsel %vm378, %v371, 920167782
  %v385 = vsel %vm377, %v368, %v384
  %v386 = vsel %vm376, %v383, %v385
  %v387 = vsel %vm375, %v365, %v368
  %v388 = vsel %vm378, %v374, 1326507024
  %v389 = vsel %vm377, %v371, %v388
  %v390 = vsel %vm376, %v387, %v389
  %v391 = vshll.u32 %v351, 8
  %v392 = vmul.u32.u64.compose %v391, %v390
  %v393 = vextract.low.u32 %v392
  %v394 = vextract.high.u32 %v392
  %v395 = vmul.u32.u64.compose %v391, %v386
  %v396 = vextract.low.u32 %v395
  %v397 = vextract.high.u32 %v395
  %v398 = vmul.u32 %v391, %v382
  %v399 = vadd.s32 %v394, %v396
  %vm400 = vc.u32 %v394, %v396
  %v401 = vadd.s32 %v397, 1
  %v402 = vsel %vm400, %v401, %v397
  %v403 = vadd.s32 %v398, %v402
  %v404 = vadd.s32 %v403, 536870912
  %v405 = vshrl.u32 %v404, 30
  %v406 = vshll.u32 %v405, 30
  %v407 = vsub.s32 %v403, %v406
  %vm408 = vcmp.lt.s32.totalorder %v407, 0
  %v409 = vsub.s32 0, %v407
  %v410 = vsel %vm408, %v409, %v407
  %v411 = vclz %v410
  %v412 = vsub.s32 %v411, 2
  %vm413 = vcmp.gt.s32.totalorder 0, %v412
  %v414 = vsel %vm413, 0, %v412
  %v415 = vsub.s32 32, %v414
  %v416 = vshll.u32 %v407, %v414
  %v417 = vshrl.u32 %v399, %v415
  %v418 = vor.u32 %v416, %v417
  %v419 = vsub.s32 4294967266, %v414
  %v420 = vadd.s32 %v419, 127
  %v421 = vshll.u32 %v420, 23
  %v422 = vor.u32 4788187, %v421
  %v423 = vand.u32 2147483647, %v422
  %v425 = vcvt.s32.f32 %v418
  %v426 = vmul.f32 %v425, %v423
  %v427 = vxor.u32 %v426, 2147483648
  %v428 = vsel %vm345, %v427, %v426
  %v429 = vsub.s32 4, %v405
  %v430 = vsel %vm345, %v429, %v405
  %v431 = vsel %vm344, %v31, %v428
  %v432 = vsel %vm344, 0, %v430
  %v433 = vcosq.f32.pop %v431
  %v434 = vsinq.f32.pop %v431
  %vm435 = vweird.f32 %v31
  %v436 = vand.u32 %v432, 3
  %vm437 = vcmp.lt.s32.totalorder %v436, 2
  %vm438 = vcmp.eq.s32.totalorder %v436, 0
  %v439 = vxor.u32 %v434, 2147483648
  %v440 = vsel %vm438, %v433, %v439
  %vm441 = vcmp.eq.s32.totalorder %v436, 2
  %v442 = vxor.u32 %v433, 2147483648
  %v443 = vsel %vm441, %v442, %v434
  %v444 = vsel %vm437, %v440, %v443
  %v445 = vsel %vm435, nan, %v444
  %vm448 = vcmask 1040384
  %v449 = vrot.slane %v135, 7
  %v450 = vrot.slane %v239, 7
  %v451 = vsel %vm448, %v449, %v450
  %v457 = vrot.slane %v342, 7
  %v458 = vrot.slane %v445, 7
  %v459 = vsel %vm448, %v457, %v458
  %v463 = vsel %vm448, %v11, %v449
  %v464 = vsel %vm448, %v450, %v457
  %vm465 = vcmask 64512
  %466 = vst.msk [vmem:[%s2] sm:$0xff] %vm465, %v463
  %467 = vst.msk [vmem:[%s2 + $0x8] sm:$0xff] %vm465, %v451
  %468 = vst.msk [vmem:[%s2 + $0x10] sm:$0xff] %vm465, %v464
  %469 = vst.msk [vmem:[%s2 + $0x18] sm:$0xff] %vm465, %v459
  %vm470 = vcmask 57344
  %471 = vst.msk [vmem:[%s2 + $0x20] sm:$0x1] %vm470, %v458
  // Predicated region
  $region10: #{tpu_custom_call.1} parent=0 // pred_check
    _
  $region11: #{tpu_custom_call.1} parent=0 // pred_check_branch
    %473 = sbr.rel (0) target = $region13
  $region12: #{tpu_custom_call.1} parent=0 // pred_region
    _
  $region13: #{tpu_custom_call.1} parent=0 // pred_fallthru
    _
  // Predicated region
  $region14: #{tpu_custom_call.1} parent=0 // pred_check
    _
  $region15: #{tpu_custom_call.1} parent=0 // pred_check_branch
    %475 = sbr.rel (0) target = $region17
  $region16: #{tpu_custom_call.1} parent=0 // pred_region
    _
  $region17: #{tpu_custom_call.1} parent=0 // pred_fallthru
    _

</llo_original>
